<compile_context>
chip_gen: v7x
topology: tpu7x:2x2x1
jax: 0.10.0
libtpu: 0.0.40
codegen_flags: <defaults>
</compile_context>

<pallas_src>
import numpy as np
import jax
import jax.numpy as jnp
from jax.experimental import pallas as pl
from jax.experimental.pallas import tpu as pltpu


# ------------------------- parameter construction (glue, numpy) ------------

def _round_up(a: int, b: int) -> int:
    return (a + b - 1) // b * b


def hann_window_periodic(win_length: int) -> np.ndarray:
    n = np.arange(win_length, dtype=np.float64)
    return 0.5 * (1.0 - np.cos(2.0 * np.pi * n / win_length))


def dft_matrices(n_fft: int) -> tuple[np.ndarray, np.ndarray]:
    # onesided real DFT:  X[f] = sum_n x[n] * exp(-2j*pi*f*n/N),  f = 0..N/2
    n_freq = n_fft // 2 + 1
    n = np.arange(n_fft, dtype=np.float64)[:, None]
    f = np.arange(n_freq, dtype=np.float64)[None, :]
    ang = 2.0 * np.pi * n * f / n_fft
    cos_mat = np.cos(ang)            # (n_fft, n_freq)
    sin_mat = -np.sin(ang)           # (n_fft, n_freq)
    return cos_mat, sin_mat


def _hz_to_mel_slaney(freq):
    freq = np.asarray(freq, dtype=np.float64)
    f_sp = 200.0 / 3.0
    min_log_hz = 1000.0
    min_log_mel = min_log_hz / f_sp
    logstep = np.log(6.4) / 27.0
    return np.where(freq >= min_log_hz,
                    min_log_mel + np.log(np.maximum(freq, 1e-10) / min_log_hz) / logstep,
                    freq / f_sp)


def _mel_to_hz_slaney(mels):
    mels = np.asarray(mels, dtype=np.float64)
    f_sp = 200.0 / 3.0
    min_log_hz = 1000.0
    min_log_mel = min_log_hz / f_sp
    logstep = np.log(6.4) / 27.0
    return np.where(mels >= min_log_mel,
                    min_log_hz * np.exp(logstep * (mels - min_log_mel)),
                    f_sp * mels)


def melscale_fbanks_slaney(n_freqs, f_min, f_max, n_mels, sample_rate) -> np.ndarray:
    # matches torchaudio.functional.melscale_fbanks(norm='slaney', mel_scale='slaney')
    all_freqs = np.linspace(0.0, sample_rate // 2, n_freqs)
    m_min = _hz_to_mel_slaney(f_min)
    m_max = _hz_to_mel_slaney(f_max)
    m_pts = np.linspace(m_min, m_max, n_mels + 2)
    f_pts = _mel_to_hz_slaney(m_pts)
    f_diff = f_pts[1:] - f_pts[:-1]                            # (n_mels+1,)
    slopes = f_pts[None, :] - all_freqs[:, None]               # (n_freqs, n_mels+2)
    down_slopes = (-slopes[:, :-2]) / f_diff[:-1]
    up_slopes = slopes[:, 2:] / f_diff[1:]
    fb = np.maximum(0.0, np.minimum(down_slopes, up_slopes))   # (n_freqs, n_mels)
    enorm = 2.0 / (f_pts[2:n_mels + 2] - f_pts[:n_mels])
    fb = fb * enorm[None, :]
    return fb


# ------------------------------- Pallas kernel ------------------------------

def _logmel_kernel(frames_ref, w_ref, fb_ref, out_ref):
    # frames_ref: (tm, n_fft) bf16          (Hann window folded into w_ref)
    # w_ref:      (n_fft, 2*Fp) bf16        ([cos | sin] columns, zero-padded)
    # fb_ref:     (Fp, n_mels_pad) bf16
    # out_ref:    (tm, n_mels_pad) f32
    y = jnp.dot(frames_ref[...], w_ref[...],
                preferred_element_type=jnp.float32)                   # one MXU pass
    nfp = y.shape[-1] // 2                                            # 128-aligned split
    re = y[:, :nfp]
    im = y[:, nfp:]
    mag = jnp.sqrt(re * re + im * im + 1e-6)                          # VPU/EUP (f32)
    mel = jnp.dot(mag.astype(jnp.bfloat16), fb_ref[...],
                  preferred_element_type=jnp.float32)                 # MXU
    out_ref[...] = jnp.log(jnp.maximum(mel, 1e-5))                    # EUP


def logmel_pallas(frames, w_mat, fbank, *, tm, single_buffer_consts=True):
    M, n_fft = frames.shape
    w_cols = w_mat.shape[1]
    n_freq_p = fbank.shape[0]
    n_mels_p = fbank.shape[1]
    assert M % tm == 0 and tm % 8 == 0
    assert w_cols == 2 * n_freq_p

    # Constant operands are DMA'd once (constant index_map); single-buffer them.
    const_kw = ({"pipeline_mode": pl.Buffered(1)}
                if (single_buffer_consts and hasattr(pl, "Buffered")) else {})

    return pl.pallas_call(
        _logmel_kernel,
        out_shape=jax.ShapeDtypeStruct((M, n_mels_p), jnp.float32),
        grid_spec=pl.GridSpec(
            grid=(M // tm,),
            in_specs=[
                pl.BlockSpec((tm, n_fft), lambda i: (i, 0)),                 # streamed frames
                pl.BlockSpec((n_fft, w_cols), lambda i: (0, 0), **const_kw),  # resident [cos|sin]
                pl.BlockSpec((n_freq_p, n_mels_p), lambda i: (0, 0), **const_kw),
            ],
            out_specs=pl.BlockSpec((tm, n_mels_p), lambda i: (i, 0)),
        ),
        compiler_params=pltpu.CompilerParams(
            dimension_semantics=("parallel",),
            vmem_limit_bytes=56 * 1024 * 1024,     # <= v7x 64 MiB physical, > v5e/v6e defaults
        ),
    )(frames, w_mat, fbank)


# ------------------------------- full module --------------------------------

class LogMelSpectrogramPallas:
    def __init__(self, sample_rate=44032, n_fft=2048, win_length=2048,
                 hop_length=512, n_mels=128, center=False, f_min=0.0, f_max=None,
                 frame_tile=256):
        assert n_fft == win_length, "this implementation assumes n_fft == win_length"
        assert not center, "this implementation assumes center=False (module default)"
        self.sample_rate = sample_rate
        self.n_fft = n_fft
        self.win_length = win_length
        self.hop_length = hop_length
        self.n_mels = n_mels
        self.f_min = f_min
        self.f_max = f_max or sample_rate // 2
        self.frame_tile = frame_tile

        n_freq = n_fft // 2 + 1
        self._n_freq = n_freq

        win = hann_window_periodic(win_length)                                   # f64
        cos_mat, sin_mat = dft_matrices(n_fft)                                   # f64
        fb = melscale_fbanks_slaney(n_freq, self.f_min, self.f_max,
                                    n_mels, sample_rate)                         # f64

        # f32 copies for the pure-JAX reference (exact module math).
        self._win_f32 = jnp.asarray(win[None, :], dtype=jnp.float32)             # (1, n_fft)
        self._cos_f32 = jnp.asarray(cos_mat, dtype=jnp.float32)                  # (n_fft, n_freq)
        self._sin_f32 = jnp.asarray(sin_mat, dtype=jnp.float32)
        self._fb_f32 = jnp.asarray(fb, dtype=jnp.float32)                        # (n_freq, n_mels)

        # The Nyquist bin has zero weight in every slaney filter whenever
        # f_max <= sample_rate/2 (the default), so dropping it from the MXU path
        # is lossless for the mel output and keeps the freq axis 128-aligned
        # (1024 instead of 1152 padded columns).
        drop_nyquist = bool(np.allclose(fb[-1, :], 0.0, atol=1e-10))
        n_freq_used = n_freq - 1 if drop_nyquist else n_freq
        n_freq_pad = _round_up(n_freq_used, 128)
        n_mels_pad = _round_up(n_mels, 128)

        # Kernel constants: Hann window folded into the DFT matrices, cos/sin
        # concatenated into a single RHS, zero-padded to lane-aligned widths,
        # cast to bf16 for the native MXU path.
        cos_w = win[:, None] * cos_mat[:, :n_freq_used]                           # (n_fft, Fu)
        sin_w = win[:, None] * sin_mat[:, :n_freq_used]
        w = np.zeros((n_fft, 2 * n_freq_pad), dtype=np.float64)
        w[:, :n_freq_used] = cos_w
        w[:, n_freq_pad:n_freq_pad + n_freq_used] = sin_w
        fb_p = np.zeros((n_freq_pad, n_mels_pad), dtype=np.float64)
        fb_p[:n_freq_used, :n_mels] = fb[:n_freq_used]   # padded rows/cols are zero

        self.w_mat = jnp.asarray(w, dtype=jnp.bfloat16)
        self.fbank = jnp.asarray(fb_p, dtype=jnp.bfloat16)

    # TODO(synk): reflect-pad + overlapped framing stays in the XLA wrapper;
    # building the tm overlapping frames in-kernel from a contiguous audio window
    # would cut HBM read traffic ~n_fft/hop x for long audio, at the cost of
    # manual-DMA framing logic.
    def _frames(self, x):
        # x: (B, T) float32  (a (B, 1, T) input is squeezed, like the torch module)
        if x.ndim == 3:
            x = jnp.squeeze(x, axis=1)
        pad_l = (self.win_length - self.hop_length) // 2
        pad_r = (self.win_length - self.hop_length + 1) // 2
        y = jnp.pad(x, ((0, 0), (pad_l, pad_r)), mode="reflect")
        B, T = y.shape
        win, hop = self.win_length, self.hop_length
        n_frames = (T - win) // hop + 1
        if win % hop == 0:
            # frame i = concat of win/hop consecutive hop-sized chunks starting at
            # chunk i -> a few contiguous slices instead of an XLA gather.
            r = win // hop
            n_chunks = T // hop
            chunks = y[:, :n_chunks * hop].reshape(B, n_chunks, hop)
            frames = jnp.concatenate(
                [chunks[:, j:j + n_frames, :] for j in range(r)], axis=2)         # (B, F, win)
        else:
            idx = (jnp.arange(n_frames)[:, None] * hop
                   + jnp.arange(win)[None, :])                                    # (F, win)
            frames = y[:, idx]                                                    # (B, F, win)
        return frames.reshape(B * n_frames, win), B, n_frames

    def __call__(self, x):
        frames, B, n_frames = self._frames(x)                                     # (M, n_fft) f32
        M = frames.shape[0]
        # Frame tile: big enough to amortize per-step overhead and fill the MXU,
        # but keep >= 2 grid steps when possible so dimension_semantics=("parallel",)
        # can shard the frame axis across both TensorCores on v7x.
        tm = min(self.frame_tile, _round_up(M, 8))
        if M > 8:
            tm = min(tm, _round_up((M + 1) // 2, 8))
        M_pad = _round_up(M, tm)
        frames = frames.astype(jnp.bfloat16)
        if M_pad != M:
            frames = jnp.pad(frames, ((0, M_pad - M), (0, 0)))
        try:
            out = logmel_pallas(frames, self.w_mat, self.fbank, tm=tm,
                                single_buffer_consts=True)
        except Exception:
            # Fallback for JAX builds where BlockSpec pipeline_mode / Buffered(1)
            # is not supported: same kernel, default double-buffered constants.
            out = logmel_pallas(frames, self.w_mat, self.fbank, tm=tm,
                                single_buffer_consts=False)
        out = out[:M, :self.n_mels].reshape(B, n_frames, self.n_mels)
        return jnp.transpose(out, (0, 2, 1))                                      # (B, n_mels, F)

    # pure-JAX f32 reference (same semantics as the torch module) for sanity checking
    def reference(self, x):
        frames, B, n_frames = self._frames(x)
        fw = frames * self._win_f32
        re = fw @ self._cos_f32
        im = fw @ self._sin_f32
        mag = jnp.sqrt(re * re + im * im + 1e-6)
        mel = mag @ self._fb_f32
        out = jnp.log(jnp.maximum(mel, 1e-5))
        return jnp.transpose(out.reshape(B, n_frames, self.n_mels), (0, 2, 1))


if __name__ == "__main__":
    key = jax.random.PRNGKey(0)
    B, T = 2, 1024                      # small audio: 2 clips of 1024 samples
    x = jax.random.normal(key, (B, T), dtype=jnp.float32)

    # small config consistent with the module (scaled-down n_fft / n_mels)
    mod = LogMelSpectrogramPallas(sample_rate=4096, n_fft=256, win_length=256,
                                  hop_length=64, n_mels=32)

    out = jax.block_until_ready(mod(x))
    ref = jax.block_until_ready(mod.reference(x))

    assert out.shape == ref.shape == (B, 32, 16), out.shape
    # bf16 MXU matmuls vs. f32 reference: log-domain agreement to a few percent
    assert np.allclose(np.asarray(out), np.asarray(ref), rtol=5e-2, atol=5e-2)

    print("KERNEL_OK")
</pallas_src>

<mosaic_0001>
module attributes {stable_mosaic.version = 11 : i64} {
  func.func @_logmel_kernel(%arg0: i32, %arg1: memref<16x256xbf16, #tpu.memory_space<vmem>>, %arg2: memref<256x256xbf16, #tpu.memory_space<vmem>>, %arg3: memref<128x128xbf16, #tpu.memory_space<vmem>>, %arg4: memref<16x128xf32, #tpu.memory_space<vmem>>) attributes {dimension_semantics = [#tpu.dimension_semantics<parallel>], iteration_bounds = array<i64: 2>, scalar_prefetch = 0 : i64, scratch_operands = 0 : i64, tpu.core_type = #tpu.core_type<tc>, window_params = [{transform_indices = @transform_0, window_bounds = array<i64: 16, 256>}, {pipeline_mode = #tpu.pipeline_mode<synchronous>, transform_indices = @transform_1, window_bounds = array<i64: 256, 256>}, {pipeline_mode = #tpu.pipeline_mode<synchronous>, transform_indices = @transform_2, window_bounds = array<i64: 128, 128>}, {transform_indices = @transform_3, window_bounds = array<i64: 16, 128>}]} {
    %c0 = arith.constant 0 : index
    %c0_0 = arith.constant 0 : index
    %0 = vector.load %arg1[%c0, %c0_0] : memref<16x256xbf16, #tpu.memory_space<vmem>>, vector<16x256xbf16>
    %c0_1 = arith.constant 0 : index
    %c0_2 = arith.constant 0 : index
    %1 = vector.load %arg2[%c0_1, %c0_2] : memref<256x256xbf16, #tpu.memory_space<vmem>>, vector<256x256xbf16>
    %cst = arith.constant dense<0.000000e+00> : vector<16x256xf32>
    %2 = tpu.matmul %0, %1, %cst {dimension_numbers = #tpu.dot_dimension_numbers<[1], [0], [0], [1], [0, 0, 1, 1], [], []>} : vector<16x256xbf16>, vector<256x256xbf16>, vector<16x256xf32> -> vector<16x256xf32>
    %3 = vector.extract_strided_slice %2 {offsets = [0, 0], sizes = [16, 128], strides = [1, 1]} : vector<16x256xf32> to vector<16x128xf32>
    %4 = vector.extract_strided_slice %2 {offsets = [0, 128], sizes = [16, 128], strides = [1, 1]} : vector<16x256xf32> to vector<16x128xf32>
    %5 = arith.mulf %3, %3 : vector<16x128xf32>
    %6 = arith.mulf %4, %4 : vector<16x128xf32>
    %7 = arith.addf %5, %6 : vector<16x128xf32>
    %cst_3 = arith.constant 9.99999997E-7 : f32
    %8 = vector.broadcast %cst_3 : f32 to vector<16x128xf32>
    %9 = arith.addf %7, %8 : vector<16x128xf32>
    %10 = math.sqrt %9 : vector<16x128xf32>
    %11 = arith.truncf %10 : vector<16x128xf32> to vector<16x128xbf16>
    %c0_4 = arith.constant 0 : index
    %c0_5 = arith.constant 0 : index
    %12 = vector.load %arg3[%c0_4, %c0_5] : memref<128x128xbf16, #tpu.memory_space<vmem>>, vector<128x128xbf16>
    %cst_6 = arith.constant dense<0.000000e+00> : vector<16x128xf32>
    %13 = tpu.matmul %11, %12, %cst_6 {dimension_numbers = #tpu.dot_dimension_numbers<[1], [0], [0], [1], [0, 0, 1, 1], [], []>} : vector<16x128xbf16>, vector<128x128xbf16>, vector<16x128xf32> -> vector<16x128xf32>
    %cst_7 = arith.constant 9.99999974E-6 : f32
    %14 = vector.broadcast %cst_7 : f32 to vector<16x128xf32>
    %15 = arith.maximumf %13, %14 : vector<16x128xf32>
    %16 = math.log %15 : vector<16x128xf32>
    %c0_8 = arith.constant 0 : index
    %c0_9 = arith.constant 0 : index
    %17 = vector.load %arg4[%c0_8, %c0_9] : memref<16x128xf32, #tpu.memory_space<vmem>>, vector<16x128xf32>
    tpu.vector_store %arg4[%c0_8, %c0_9], %16 {strides = array<i32>} : memref<16x128xf32, #tpu.memory_space<vmem>>, vector<16x128xf32>,
    return
  }
  func.func @transform_0(%arg0: i32) -> (i32, i32) {
    %c0_i32 = arith.constant 0 : i32
    %c0_i32_0 = arith.constant 0 : i32
    return %arg0, %c0_i32 : i32, i32
  }
  func.func @transform_1(%arg0: i32) -> (i32, i32) {
    %c0_i32 = arith.constant 0 : i32
    %c0_i32_0 = arith.constant 0 : i32
    %c0_i32_1 = arith.constant 0 : i32
    return %c0_i32, %c0_i32_0 : i32, i32
  }
  func.func @transform_2(%arg0: i32) -> (i32, i32) {
    %c0_i32 = arith.constant 0 : i32
    %c0_i32_0 = arith.constant 0 : i32
    %c0_i32_1 = arith.constant 0 : i32
    return %c0_i32, %c0_i32_0 : i32, i32
  }
  func.func @transform_3(%arg0: i32) -> (i32, i32) {
    %c0_i32 = arith.constant 0 : i32
    %c0_i32_0 = arith.constant 0 : i32
    return %arg0, %c0_i32 : i32, i32
  }
}

module attributes {stable_mosaic.version = 11 : i64} {
  func.func @_logmel_kernel(%arg0: i32, %arg1: memref<16x256xbf16, #tpu.memory_space<vmem>>, %arg2: memref<256x256xbf16, #tpu.memory_space<vmem>>, %arg3: memref<128x128xbf16, #tpu.memory_space<vmem>>, %arg4: memref<16x128xf32, #tpu.memory_space<vmem>>) attributes {dimension_semantics = [#tpu.dimension_semantics<parallel>], iteration_bounds = array<i64: 2>, scalar_prefetch = 0 : i64, scratch_operands = 0 : i64, tpu.core_type = #tpu.core_type<tc>, window_params = [{transform_indices = @transform_0, window_bounds = array<i64: 16, 256>}, {pipeline_mode = #tpu.pipeline_mode<synchronous>, transform_indices = @transform_1, window_bounds = array<i64: 256, 256>}, {pipeline_mode = #tpu.pipeline_mode<synchronous>, transform_indices = @transform_2, window_bounds = array<i64: 128, 128>}, {transform_indices = @transform_3, window_bounds = array<i64: 16, 128>}]} {
    %c0 = arith.constant 0 : index
    %c0_0 = arith.constant 0 : index
    %0 = vector.load %arg1[%c0, %c0_0] : memref<16x256xbf16, #tpu.memory_space<vmem>>, vector<16x256xbf16>
    %c0_1 = arith.constant 0 : index
    %c0_2 = arith.constant 0 : index
    %1 = vector.load %arg2[%c0_1, %c0_2] : memref<256x256xbf16, #tpu.memory_space<vmem>>, vector<256x256xbf16>
    %cst = arith.constant dense<0.000000e+00> : vector<16x256xf32>
    %2 = tpu.matmul %0, %1, %cst {dimension_numbers = #tpu.dot_dimension_numbers<[1], [0], [0], [1], [0, 0, 1, 1], [], []>} : vector<16x256xbf16>, vector<256x256xbf16>, vector<16x256xf32> -> vector<16x256xf32>
    %3 = vector.extract_strided_slice %2 {offsets = [0, 0], sizes = [16, 128], strides = [1, 1]} : vector<16x256xf32> to vector<16x128xf32>
    %4 = vector.extract_strided_slice %2 {offsets = [0, 128], sizes = [16, 128], strides = [1, 1]} : vector<16x256xf32> to vector<16x128xf32>
    %5 = arith.mulf %3, %3 : vector<16x128xf32>
    %6 = arith.mulf %4, %4 : vector<16x128xf32>
    %7 = arith.addf %5, %6 : vector<16x128xf32>
    %cst_3 = arith.constant 9.99999997E-7 : f32
    %8 = vector.broadcast %cst_3 : f32 to vector<16x128xf32>
    %9 = arith.addf %7, %8 : vector<16x128xf32>
    %10 = math.sqrt %9 : vector<16x128xf32>
    %11 = arith.truncf %10 : vector<16x128xf32> to vector<16x128xbf16>
    %c0_4 = arith.constant 0 : index
    %c0_5 = arith.constant 0 : index
    %12 = vector.load %arg3[%c0_4, %c0_5] : memref<128x128xbf16, #tpu.memory_space<vmem>>, vector<128x128xbf16>
    %cst_6 = arith.constant dense<0.000000e+00> : vector<16x128xf32>
    %13 = tpu.matmul %11, %12, %cst_6 {dimension_numbers = #tpu.dot_dimension_numbers<[1], [0], [0], [1], [0, 0, 1, 1], [], []>} : vector<16x128xbf16>, vector<128x128xbf16>, vector<16x128xf32> -> vector<16x128xf32>
    %cst_7 = arith.constant 9.99999974E-6 : f32
    %14 = vector.broadcast %cst_7 : f32 to vector<16x128xf32>
    %15 = arith.maximumf %13, %14 : vector<16x128xf32>
    %16 = math.log %15 : vector<16x128xf32>
    %c0_8 = arith.constant 0 : index
    %c0_9 = arith.constant 0 : index
    %17 = vector.load %arg4[%c0_8, %c0_9] : memref<16x128xf32, #tpu.memory_space<vmem>>, vector<16x128xf32>
    tpu.vector_store %arg4[%c0_8, %c0_9], %16 {strides = array<i32>} : memref<16x128xf32, #tpu.memory_space<vmem>>, vector<16x128xf32>,
    return
  }
  func.func @transform_0(%arg0: i32) -> (i32, i32) {
    %c0_i32 = arith.constant 0 : i32
    %c0_i32_0 = arith.constant 0 : i32
    return %arg0, %c0_i32 : i32, i32
  }
  func.func @transform_1(%arg0: i32) -> (i32, i32) {
    %c0_i32 = arith.constant 0 : i32
    %c0_i32_0 = arith.constant 0 : i32
    %c0_i32_1 = arith.constant 0 : i32
    return %c0_i32, %c0_i32_0 : i32, i32
  }
  func.func @transform_2(%arg0: i32) -> (i32, i32) {
    %c0_i32 = arith.constant 0 : i32
    %c0_i32_0 = arith.constant 0 : i32
    %c0_i32_1 = arith.constant 0 : i32
    return %c0_i32, %c0_i32_0 : i32, i32
  }
  func.func @transform_3(%arg0: i32) -> (i32, i32) {
    %c0_i32 = arith.constant 0 : i32
    %c0_i32_0 = arith.constant 0 : i32
    return %arg0, %c0_i32 : i32, i32
  }
}

</mosaic_0001>

<llo_original>
// kernel: tpu_custom_call.1
$region0: #{tpu_custom_call.1}
  #allocation0 [shape = 'u32[]', space=smem, size = 0x4, offset = 0x4, fixed_abs, tag = 'smem constant byte address 0x4 - core index']
  #allocation1 [shape = 'u32[144,128]{1,0:T(1,128)}', space=vmem, size = 0x12000, scoped, tag = 'internal scratch']
  %s0 = inlined_call_operand.hbm [shape: bf16[32,256], index: 0, kind: input, shape index: {}]
  %s1 = inlined_call_operand.hbm [shape: bf16[256,256], index: 1, kind: input, shape index: {}]
  %s2 = inlined_call_operand.hbm [shape: bf16[128,128], index: 2, kind: input, shape index: {}]
  %s3 = inlined_call_operand.hbm [shape: f32[32,128], index: 3, kind: output, shape index: {}]
  %s4 = sld [smem:[#allocation0]]
  $region57: #{tpu_custom_call.1} parent=0
    _
  %s6 = ssub.s32 1, %s4
  %s7 = scalar_select 0, %s6, %s4
  $region1: #{tpu_custom_call.1} parent=0
    #allocation2 [shape = 'u8[16384]{0}', space=vmem, size = 0x4000, scoped, tag = 'input window, operand 0']
    #allocation3 [shape = 's32[2]{0}', space=sflag, size = 0x8, scoped, tag = 'scoped memory for tpu_custom_call.1']
    #allocation4 [shape = 's32[2]{0}', space=sflag, size = 0x8, scoped, tag = 'scoped memory for tpu_custom_call.1']
    #allocation5 [shape = 'u8[131072]{0}', space=vmem, size = 0x20000, scoped, tag = 'input window, operand 1, single buffered']
    #allocation6 [shape = 's32[1]{0}', space=sflag, size = 0x4, scoped, tag = 'scoped memory for tpu_custom_call.1']
    #allocation7 [shape = 'u8[32768]{0}', space=vmem, size = 0x8000, scoped, tag = 'input window, operand 2, single buffered']
    #allocation8 [shape = 'u8[16384]{0}', space=vmem, size = 0x4000, scoped, tag = 'output window, operand 0']
    %8 = vsyncpa [#allocation3], 0
    %s9 = scalar_lea.sflag [#allocation3], 1
    %10 = vsyncpa %s9, 0
    %11 = vsyncpa [#allocation6], 0
    %12 = vsyncpa [#allocation4], 0
    %s13 = scalar_lea.sflag [#allocation4], 1
    %14 = vsyncpa %s13, 0
    loop: start=0, step=1, limit=4
    $region2: #{tpu_custom_call.1} parent=1 // loop_pre_header
      _
    $region3: #{tpu_custom_call.1} parent=1 // loop_header
      %s16 = sphi 0, %s20
      %p17 = scmp.ge.s32.totalorder %s16, 4
      %s26 = sphi 0, %s28
      %s29 = sphi 0, %s26
      %s30 = sphi 0, %s29
      %s46 = sphi 0, %s30
      %s50 = sphi 0, %s50
      %s52 = sphi 0, %s50
      %s53 = sphi 0, %s52
      %s67 = sphi 0, %s53
      %s71 = sphi 0, %s71
      %s73 = sphi 0, %s71
      %s74 = sphi 0, %s73
      %s88 = sphi 0, %s74
      %s94 = sphi 0, %s96
      %s97 = sphi 0, %s94
      %s98 = sphi 0, %s97
      %s114 = sphi 0, %s98
    $region4: #{tpu_custom_call.1} parent=1 // loop_header_branch
      %19 = sbr.rel (%p17) target = $region8
    $region5: #{tpu_custom_call.1} parent=1 // loop_body
      %s21 = ssub.s32 %s16, 1
      %s22 = ssub.s32 %s16, 2
      %s23 = sadd.s32 %s16, 1
      %s24 = ssub.s32 %s16, %s23
      %p25 = scmp.eq.s32.totalorder %s24, 0
      %s27 = sadd.s32 %s26, 1
      %s28 = scalar_select %p25, %s26, %s27
      %p31 = pneg %p25
      %p32 = scmp.eq.s32.totalorder %s16, 1
      %p33 = por %p31, %p32
      %p34 = scmp.ne.s32.totalorder %s26, %s29
      %p35 = scmp.eq.s32.totalorder %s16, 0
      %p36 = por %p34, %p35
      %p37 = scmp.ne.s32.totalorder %s26, %s29
      %p38 = scmp.eq.s32.totalorder %s21, 1
      %p39 = por %p37, %p38
      %p40 = scmp.ne.s32.totalorder %s29, %s30
      %p41 = scmp.eq.s32.totalorder %s21, 0
      %p42 = por %p40, %p41
      %p43 = scmp.ne.s32.totalorder %s29, %s30
      %p44 = scmp.eq.s32.totalorder %s22, 1
      %p45 = por %p43, %p44
      %p47 = scmp.ne.s32.totalorder %s30, %s46
      %p48 = scmp.eq.s32.totalorder %s22, 0
      %p49 = por %p47, %p48
      %s51 = sadd.s32 %s50, 1
      %p54 = scmp.eq.s32.totalorder %s16, 1
      %p55 = scmp.ne.s32.totalorder %s50, %s52
      %p56 = scmp.eq.s32.totalorder %s16, 0
      %p57 = por %p55, %p56
      %p58 = scmp.ne.s32.totalorder %s50, %s52
      %p59 = scmp.eq.s32.totalorder %s21, 1
      %p60 = por %p58, %p59
      %p61 = scmp.ne.s32.totalorder %s52, %s53
      %p62 = scmp.eq.s32.totalorder %s21, 0
      %p63 = por %p61, %p62
      %p64 = scmp.ne.s32.totalorder %s52, %s53
      %p65 = scmp.eq.s32.totalorder %s22, 1
      %p66 = por %p64, %p65
      %p68 = scmp.ne.s32.totalorder %s53, %s67
      %p69 = scmp.eq.s32.totalorder %s22, 0
      %p70 = por %p68, %p69
      %s72 = sadd.s32 %s71, 1
      %p75 = scmp.eq.s32.totalorder %s16, 1
      %p76 = scmp.ne.s32.totalorder %s71, %s73
      %p77 = scmp.eq.s32.totalorder %s16, 0
      %p78 = por %p76, %p77
      %p79 = scmp.ne.s32.totalorder %s71, %s73
      %p80 = scmp.eq.s32.totalorder %s21, 1
      %p81 = por %p79, %p80
      %p82 = scmp.ne.s32.totalorder %s73, %s74
      %p83 = scmp.eq.s32.totalorder %s21, 0
      %p84 = por %p82, %p83
      %p85 = scmp.ne.s32.totalorder %s73, %s74
      %p86 = scmp.eq.s32.totalorder %s22, 1
      %p87 = por %p85, %p86
      %p89 = scmp.ne.s32.totalorder %s74, %s88
      %p90 = scmp.eq.s32.totalorder %s22, 0
      %p91 = por %p89, %p90
      %s92 = ssub.s32 %s16, %s23
      %p93 = scmp.eq.s32.totalorder %s92, 0
      %s95 = sadd.s32 %s94, 1
      %s96 = scalar_select %p93, %s94, %s95
      %p99 = pneg %p93
      %p100 = scmp.eq.s32.totalorder %s16, 1
      %p101 = por %p99, %p100
      %p102 = scmp.ne.s32.totalorder %s94, %s97
      %p103 = scmp.eq.s32.totalorder %s16, 0
      %p104 = por %p102, %p103
      %p105 = scmp.ne.s32.totalorder %s94, %s97
      %p106 = scmp.eq.s32.totalorder %s21, 1
      %p107 = por %p105, %p106
      %p108 = scmp.ne.s32.totalorder %s97, %s98
      %p109 = scmp.eq.s32.totalorder %s21, 0
      %p110 = por %p108, %p109
      %p111 = scmp.ne.s32.totalorder %s97, %s98
      %p112 = scmp.eq.s32.totalorder %s22, 1
      %p113 = por %p111, %p112
      %p115 = scmp.ne.s32.totalorder %s98, %s114
      %p116 = scmp.eq.s32.totalorder %s22, 0
      %p117 = por %p115, %p116
      %p118 = scmp.le.s32.totalorder 1, %s16
      %p119 = scmp.lt.s32.totalorder %s16, 3
      %p120 = pnand %p118, %p119
      %p121 = pneg %p120
      // Predicated region
      $region9: #{tpu_custom_call.1} parent=5 // pred_check
        _
      $region10: #{tpu_custom_call.1} parent=5 // pred_check_branch
        %123 = sbr.rel (%p120) target = $region12
      $region11: #{tpu_custom_call.1} parent=5 // pred_region
        %s124 = ssub.s32 %s16, 1
        // Predicated region
        $region13: #{tpu_custom_call.1} parent=11 // pred_check
          %p125 = pneg %p63
        $region14: #{tpu_custom_call.1} parent=11 // pred_check_branch
          %127 = sbr.rel (%p125) target = $region16
        $region15: #{tpu_custom_call.1} parent=11 // pred_region
          %s129 = ssub.s32 4096, 4096
          %130 = vsyncadd [#allocation6], %s129
          %s131 = sshll.u32 [#allocation5], 4
          %s132 = int_to_ptr.vmem [resolvable:$true] %s131
          %137 = dma.hbm_to_vmem [thread:$0]  %s1, 4096, %s132, [#allocation6], 128, 128, 8
        $region16: #{tpu_custom_call.1} parent=11 // pred_fallthru
          _
        // Predicated region
        $region17: #{tpu_custom_call.1} parent=11 // pred_check
          %p138 = pneg %p84
        $region18: #{tpu_custom_call.1} parent=11 // pred_check_branch
          %140 = sbr.rel (%p138) target = $region20
        $region19: #{tpu_custom_call.1} parent=11 // pred_region
          %s142 = ssub.s32 1024, 1024
          %143 = vsyncadd [#allocation6], %s142
          %s144 = sshll.u32 [#allocation7], 4
          %s145 = int_to_ptr.vmem [resolvable:$true] %s144
          %150 = dma.hbm_to_vmem [thread:$0]  %s2, 1024, %s145, [#allocation6], 64, 64, 4
        $region20: #{tpu_custom_call.1} parent=11 // pred_fallthru
          _
      $region12: #{tpu_custom_call.1} parent=5 // pred_fallthru
        _
      %p151 = scmp.lt.s32.totalorder %s16, 2
      // Predicated region
      $region21: #{tpu_custom_call.1} parent=5 // pred_check
        %p152 = pneg %p151
      $region22: #{tpu_custom_call.1} parent=5 // pred_check_branch
        %154 = sbr.rel (%p152) target = $region24
      $region23: #{tpu_custom_call.1} parent=5 // pred_region
        // Predicated region
        $region25: #{tpu_custom_call.1} parent=23 // pred_check
          %p155 = pneg %p36
        $region26: #{tpu_custom_call.1} parent=23 // pred_check_branch
          %157 = sbr.rel (%p155) target = $region28
        $region27: #{tpu_custom_call.1} parent=23 // pred_region
          %s158 = sand.u32 %s26, 1
          %s159 = scalar_lea.sflag [#allocation3], %s158
          %s160 = sand.u32 %s26, 1
          %s161 = smul.addr %s160, 16
          %s162 = scalar_lea.vmem [#allocation2], %s161
          %s163 = smul.u32 2, %s16
          %s165 = ssub.s32 256, 256
          %166 = vsyncadd %s159, %s165
          %s167 = smul.addr %s163, 2
          %s168 = smul.addr %s167, 64
          %s169 = scalar_lea.hbm %s0, %s168
          %s170 = sshll.u32 %s162, 4
          %s171 = int_to_ptr.vmem [resolvable:$true] %s170
          %176 = dma.hbm_to_vmem [thread:$0]  %s169, 256, %s171, %s159, 128, 128, 8
        $region28: #{tpu_custom_call.1} parent=23 // pred_fallthru
          _
      $region24: #{tpu_custom_call.1} parent=5 // pred_fallthru
        _
      %p177 = scmp.le.s32.totalorder 1, %s16
      %p178 = scmp.lt.s32.totalorder %s16, 3
      %p179 = pnand %p177, %p178
      %p180 = pneg %p179
      // Predicated region
      $region29: #{tpu_custom_call.1} parent=5 // pred_check
        _
      $region30: #{tpu_custom_call.1} parent=5 // pred_check_branch
        %182 = sbr.rel (%p179) target = $region32
      $region31: #{tpu_custom_call.1} parent=5 // pred_region
        %s183 = ssub.s32 %s16, 1
        %s184 = sand.u32 %s29, 1
        %s185 = scalar_lea.sflag [#allocation3], %s184
        %s186 = sand.u32 %s29, 1
        %s187 = smul.addr %s186, 16
        %s188 = scalar_lea.vmem [#allocation2], %s187
        // Predicated region
        $region33: #{tpu_custom_call.1} parent=31 // pred_check
          %p189 = pneg %p42
        $region34: #{tpu_custom_call.1} parent=31 // pred_check_branch
          %191 = sbr.rel (%p189) target = $region36
        $region35: #{tpu_custom_call.1} parent=31 // pred_region
          %192 = dma.done %s185, 256
        $region36: #{tpu_custom_call.1} parent=31 // pred_fallthru
          _
        // Predicated region
        $region37: #{tpu_custom_call.1} parent=31 // pred_check
          %p193 = pneg %p63
        $region38: #{tpu_custom_call.1} parent=31 // pred_check_branch
          %195 = sbr.rel (%p193) target = $region40
        $region39: #{tpu_custom_call.1} parent=31 // pred_region
          %196 = dma.done [#allocation6], 4096
        $region40: #{tpu_custom_call.1} parent=31 // pred_fallthru
          _
        // Predicated region
        $region41: #{tpu_custom_call.1} parent=31 // pred_check
          %p197 = pneg %p84
        $region42: #{tpu_custom_call.1} parent=31 // pred_check_branch
          %199 = sbr.rel (%p197) target = $region44
        $region43: #{tpu_custom_call.1} parent=31 // pred_region
          %200 = dma.done [#allocation6], 1024
        $region44: #{tpu_custom_call.1} parent=31 // pred_fallthru
          _
        %s201 = sand.u32 %s29, 1
        %s202 = scalar_lea.sflag [#allocation3], %s201
        %s203 = sand.u32 %s29, 1
        %s204 = smul.addr %s203, 16
        %s205 = scalar_lea.vmem [#allocation2], %s204
        %p206 = pneg %p42
        %p207 = pneg %p39
        %p208 = pneg %p63
        %p209 = pneg %p60
        %p210 = pneg %p84
        %p211 = pneg %p81
        %p212 = pneg %p110
        %p213 = pneg %p107
        %s214 = sand.u32 %s97, 1
        %s215 = scalar_lea.sflag [#allocation4], %s214
        %s216 = sand.u32 %s97, 1
        %s217 = smul.addr %s216, 16
        %s218 = scalar_lea.vmem [#allocation8], %s217
        %s219 = smul.u32 2, %s21
        %s220 = smul.u32 2, %s21
        %v222 = vld [vmem:[%s188] sm:$0xff]
        %v223 = vld [vmem:[%s188 + $0x8] sm:$0xff]
        %v224 = vld [vmem:[#allocation5] sm:$0xff]
        %v225 = vld [vmem:[#allocation5 + $0x8] sm:$0xff]
        %v226 = vld [vmem:[#allocation5 + $0x10] sm:$0xff]
        %v227 = vld [vmem:[#allocation5 + $0x18] sm:$0xff]
        %v228 = vld [vmem:[#allocation5 + $0x20] sm:$0xff]
        %v229 = vld [vmem:[#allocation5 + $0x28] sm:$0xff]
        %v230 = vld [vmem:[#allocation5 + $0x30] sm:$0xff]
        %v231 = vld [vmem:[#allocation5 + $0x38] sm:$0xff]
        %v232 = vld [vmem:[#allocation5 + $0x40] sm:$0xff]
        %v233 = vld [vmem:[#allocation5 + $0x48] sm:$0xff]
        %v234 = vld [vmem:[#allocation5 + $0x50] sm:$0xff]
        %v235 = vld [vmem:[#allocation5 + $0x58] sm:$0xff]
        %v236 = vld [vmem:[#allocation5 + $0x60] sm:$0xff]
        %v237 = vld [vmem:[#allocation5 + $0x68] sm:$0xff]
        %v238 = vld [vmem:[#allocation5 + $0x70] sm:$0xff]
        %v239 = vld [vmem:[#allocation5 + $0x78] sm:$0xff]
        %v240 = vld [vmem:[#allocation5 + $0x80] sm:$0xff]
        %v241 = vld [vmem:[#allocation5 + $0x88] sm:$0xff]
        %v242 = vld [vmem:[#allocation5 + $0x90] sm:$0xff]
        %v243 = vld [vmem:[#allocation5 + $0x98] sm:$0xff]
        %v244 = vld [vmem:[#allocation5 + $0xa0] sm:$0xff]
        %v245 = vld [vmem:[#allocation5 + $0xa8] sm:$0xff]
        %v246 = vld [vmem:[#allocation5 + $0xb0] sm:$0xff]
        %v247 = vld [vmem:[#allocation5 + $0xb8] sm:$0xff]
        %v248 = vld [vmem:[#allocation5 + $0xc0] sm:$0xff]
        %v249 = vld [vmem:[#allocation5 + $0xc8] sm:$0xff]
        %v250 = vld [vmem:[#allocation5 + $0xd0] sm:$0xff]
        %v251 = vld [vmem:[#allocation5 + $0xd8] sm:$0xff]
        %v252 = vld [vmem:[#allocation5 + $0xe0] sm:$0xff]
        %v253 = vld [vmem:[#allocation5 + $0xe8] sm:$0xff]
        %v254 = vld [vmem:[#allocation5 + $0xf0] sm:$0xff]
        %v255 = vld [vmem:[#allocation5 + $0xf8] sm:$0xff]
        %v258 = vunpack.c.l.b16 %v222
        %v259 = vunpack.c.h.b16 %v222
        %v260 = vunpack.c.l.b16 %v223
        %v261 = vunpack.c.h.b16 %v223
        %v262 = vpack.c.b16 %v260, %v258
        %v263 = vpack.c.b16 %v261, %v259
        %v298 = vunpack.c.l.b16 %v224
        %v299 = vunpack.c.h.b16 %v224
        %v300 = vunpack.c.l.b16 %v225
        %v301 = vunpack.c.h.b16 %v225
        %v302 = vunpack.c.l.b16 %v226
        %v303 = vunpack.c.h.b16 %v226
        %v304 = vunpack.c.l.b16 %v227
        %v305 = vunpack.c.h.b16 %v227
        %v306 = vunpack.c.l.b16 %v228
        %v307 = vunpack.c.h.b16 %v228
        %v308 = vunpack.c.l.b16 %v229
        %v309 = vunpack.c.h.b16 %v229
        %v310 = vunpack.c.l.b16 %v230
        %v311 = vunpack.c.h.b16 %v230
        %v312 = vunpack.c.l.b16 %v231
        %v313 = vunpack.c.h.b16 %v231
        %v314 = vunpack.c.l.b16 %v232
        %v315 = vunpack.c.h.b16 %v232
        %v316 = vunpack.c.l.b16 %v233
        %v317 = vunpack.c.h.b16 %v233
        %v318 = vunpack.c.l.b16 %v234
        %v319 = vunpack.c.h.b16 %v234
        %v320 = vunpack.c.l.b16 %v235
        %v321 = vunpack.c.h.b16 %v235
        %v322 = vunpack.c.l.b16 %v236
        %v323 = vunpack.c.h.b16 %v236
        %v324 = vunpack.c.l.b16 %v237
        %v325 = vunpack.c.h.b16 %v237
        %v326 = vunpack.c.l.b16 %v238
        %v327 = vunpack.c.h.b16 %v238
        %v328 = vunpack.c.l.b16 %v239
        %v329 = vunpack.c.h.b16 %v239
        %v330 = vunpack.c.l.b16 %v240
        %v331 = vunpack.c.h.b16 %v240
        %v332 = vunpack.c.l.b16 %v241
        %v333 = vunpack.c.h.b16 %v241
        %v334 = vunpack.c.l.b16 %v242
        %v335 = vunpack.c.h.b16 %v242
        %v336 = vunpack.c.l.b16 %v243
        %v337 = vunpack.c.h.b16 %v243
        %v338 = vunpack.c.l.b16 %v244
        %v339 = vunpack.c.h.b16 %v244
        %v340 = vunpack.c.l.b16 %v245
        %v341 = vunpack.c.h.b16 %v245
        %v342 = vunpack.c.l.b16 %v246
        %v343 = vunpack.c.h.b16 %v246
        %v344 = vunpack.c.l.b16 %v247
        %v345 = vunpack.c.h.b16 %v247
        %v346 = vunpack.c.l.b16 %v248
        %v347 = vunpack.c.h.b16 %v248
        %v348 = vunpack.c.l.b16 %v249
        %v349 = vunpack.c.h.b16 %v249
        %v350 = vunpack.c.l.b16 %v250
        %v351 = vunpack.c.h.b16 %v250
        %v352 = vunpack.c.l.b16 %v251
        %v353 = vunpack.c.h.b16 %v251
        %v354 = vunpack.c.l.b16 %v252
        %v355 = vunpack.c.h.b16 %v252
        %v356 = vunpack.c.l.b16 %v253
        %v357 = vunpack.c.h.b16 %v253
        %v358 = vunpack.c.l.b16 %v254
        %v359 = vunpack.c.h.b16 %v254
        %v360 = vunpack.c.l.b16 %v255
        %v361 = vunpack.c.h.b16 %v255
        %v362 = vpack.c.b16 %v300, %v298
        %v363 = vpack.c.b16 %v301, %v299
        %v364 = vpack.c.b16 %v304, %v302
        %v365 = vpack.c.b16 %v305, %v303
        %v366 = vpack.c.b16 %v308, %v306
        %v367 = vpack.c.b16 %v309, %v307
        %v368 = vpack.c.b16 %v312, %v310
        %v369 = vpack.c.b16 %v313, %v311
        %v370 = vpack.c.b16 %v316, %v314
        %v371 = vpack.c.b16 %v317, %v315
        %v372 = vpack.c.b16 %v320, %v318
        %v373 = vpack.c.b16 %v321, %v319
        %v374 = vpack.c.b16 %v324, %v322
        %v375 = vpack.c.b16 %v325, %v323
        %v376 = vpack.c.b16 %v328, %v326
        %v377 = vpack.c.b16 %v329, %v327
        %v378 = vpack.c.b16 %v332, %v330
        %v379 = vpack.c.b16 %v333, %v331
        %v380 = vpack.c.b16 %v336, %v334
        %v381 = vpack.c.b16 %v337, %v335
        %v382 = vpack.c.b16 %v340, %v338
        %v383 = vpack.c.b16 %v341, %v339
        %v384 = vpack.c.b16 %v344, %v342
        %v385 = vpack.c.b16 %v345, %v343
        %v386 = vpack.c.b16 %v348, %v346
        %v387 = vpack.c.b16 %v349, %v347
        %v388 = vpack.c.b16 %v352, %v350
        %v389 = vpack.c.b16 %v353, %v351
        %v390 = vpack.c.b16 %v356, %v354
        %v391 = vpack.c.b16 %v357, %v355
        %v392 = vpack.c.b16 %v360, %v358
        %v393 = vpack.c.b16 %v361, %v359
        %426 = vmatprep.subr.bf16.mxu0 %v363
        %427 = vmatpush1.bf16.msra.mxu0 %v362
        %428 = vmatprep.subr.bf16.mxu0 %v365
        %429 = vmatpush1.bf16.msra.mxu0 %v364
        %430 = vmatprep.subr.bf16.mxu0 %v367
        %431 = vmatpush1.bf16.msra.mxu0 %v366
        %432 = vmatprep.subr.bf16.mxu0 %v369
        %433 = vmatpush1.bf16.msra.mxu0 %v368
        %434 = vmatprep.subr.bf16.mxu0 %v371
        %435 = vmatpush1.bf16.msra.mxu0 %v370
        %436 = vmatprep.subr.bf16.mxu0 %v373
        %437 = vmatpush1.bf16.msra.mxu0 %v372
        %438 = vmatprep.subr.bf16.mxu0 %v375
        %439 = vmatpush1.bf16.msra.mxu0 %v374
        %440 = vmatprep.subr.bf16.mxu0 %v377
        %441 = vmatpush1.bf16.msra.mxu0 %v376
        %442 = vmatprep.subr.bf16.mxu0 %v379
        %443 = vmatpush1.bf16.msra.mxu0 %v378
        %444 = vmatprep.subr.bf16.mxu0 %v381
        %445 = vmatpush1.bf16.msra.mxu0 %v380
        %446 = vmatprep.subr.bf16.mxu0 %v383
        %447 = vmatpush1.bf16.msra.mxu0 %v382
        %448 = vmatprep.subr.bf16.mxu0 %v385
        %449 = vmatpush1.bf16.msra.mxu0 %v384
        %450 = vmatprep.subr.bf16.mxu0 %v387
        %451 = vmatpush1.bf16.msra.mxu0 %v386
        %452 = vmatprep.subr.bf16.mxu0 %v389
        %453 = vmatpush1.bf16.msra.mxu0 %v388
        %454 = vmatprep.subr.bf16.mxu0 %v391
        %455 = vmatpush1.bf16.msra.mxu0 %v390
        %456 = vmatprep.subr.bf16.mxu0 %v393
        %457 = vmatpush1.bf16.msra.mxu0 %v392
        %458 = vmatprep.mubr.bf16.mxu0 %v263
        %459 = vmatmul.mubr.bf16.gmra.mrb[0].mxu0 %v262
        %v460 = vpop.f32.mrb[0].mxu0
        %v461 = vadd.f32 0.0, %v460
        %v462 = vpop.f32.mrb[0].mxu0
        %v463 = vadd.f32 0.0, %v462
        %v464 = vpop.f32.mrb[0].mxu0
        %v465 = vadd.f32 0.0, %v464
        %v466 = vpop.f32.mrb[0].mxu0
        %v467 = vadd.f32 0.0, %v466
        %468 = vdwg.mxu0
        %v469 = vmul.f32 %v461, %v461
        %v470 = vmul.f32 %v465, %v465
        %v471 = vmul.f32 %v463, %v463
        %v472 = vmul.f32 %v467, %v467
        %v473 = vadd.f32 %v469, %v471
        %v474 = vadd.f32 %v470, %v472
        %v475 = vadd.f32 %v473, 1e-06
        %v476 = vadd.f32 %v474, 1e-06
        %v477 = vrsqrt.pop %v475
        %v478 = vmul.f32 %v475, %v477
        %vm479 = vcmp.eq.f32.partialorder %v475, inf
        %v480 = vsel %vm479, %v475, %v478
        %vm481 = vcmp.eq.f32.partialorder %v475, 0.0
        %v482 = vand.u32 %v475, 2147483648
        %v483 = vsel %vm481, %v482, %v480
        %v484 = vrsqrt.pop %v476
        %v485 = vmul.f32 %v476, %v484
        %vm486 = vcmp.eq.f32.partialorder %v476, inf
        %v487 = vsel %vm486, %v476, %v485
        %vm488 = vcmp.eq.f32.partialorder %v476, 0.0
        %v489 = vand.u32 %v476, 2147483648
        %v490 = vsel %vm488, %v489, %v487
        %v491 = vpack.c.bf16 %v490, %v483
        %v492 = vld [vmem:[#allocation7] sm:$0xf]
        %v493 = vld [vmem:[#allocation7 + $0x4] sm:$0xf]
        %v494 = vld [vmem:[#allocation7 + $0x8] sm:$0xf]
        %v495 = vld [vmem:[#allocation7 + $0xc] sm:$0xf]
        %v496 = vld [vmem:[#allocation7 + $0x10] sm:$0xf]
        %v497 = vld [vmem:[#allocation7 + $0x14] sm:$0xf]
        %v498 = vld [vmem:[#allocation7 + $0x18] sm:$0xf]
        %v499 = vld [vmem:[#allocation7 + $0x1c] sm:$0xf]
        %v500 = vld [vmem:[#allocation7 + $0x20] sm:$0xf]
        %v501 = vld [vmem:[#allocation7 + $0x24] sm:$0xf]
        %v502 = vld [vmem:[#allocation7 + $0x28] sm:$0xf]
        %v503 = vld [vmem:[#allocation7 + $0x2c] sm:$0xf]
        %v504 = vld [vmem:[#allocation7 + $0x30] sm:$0xf]
        %v505 = vld [vmem:[#allocation7 + $0x34] sm:$0xf]
        %v506 = vld [vmem:[#allocation7 + $0x38] sm:$0xf]
        %v507 = vld [vmem:[#allocation7 + $0x3c] sm:$0xf]
        %v524 = vunpack.c.l.b16 %v492
        %v525 = vunpack.c.l.b16 %v493
        %v526 = vunpack.c.l.b16 %v494
        %v527 = vunpack.c.l.b16 %v495
        %v528 = vunpack.c.l.b16 %v496
        %v529 = vunpack.c.l.b16 %v497
        %v530 = vunpack.c.l.b16 %v498
        %v531 = vunpack.c.l.b16 %v499
        %v532 = vunpack.c.l.b16 %v500
        %v533 = vunpack.c.l.b16 %v501
        %v534 = vunpack.c.l.b16 %v502
        %v535 = vunpack.c.l.b16 %v503
        %v536 = vunpack.c.l.b16 %v504
        %v537 = vunpack.c.l.b16 %v505
        %v538 = vunpack.c.l.b16 %v506
        %v539 = vunpack.c.l.b16 %v507
        %v540 = vpack.c.b16 %v525, %v524
        %v541 = vpack.c.b16 %v527, %v526
        %v542 = vpack.c.b16 %v529, %v528
        %v543 = vpack.c.b16 %v531, %v530
        %v544 = vpack.c.b16 %v533, %v532
        %v545 = vpack.c.b16 %v535, %v534
        %v546 = vpack.c.b16 %v537, %v536
        %v547 = vpack.c.b16 %v539, %v538
        %556 = vmatprep.subr.bf16.mxu0 0
        %557 = vmatpush1.bf16.msra.mxu0 %v540
        %558 = vmatprep.subr.bf16.mxu0 0
        %559 = vmatpush1.bf16.msra.mxu0 %v541
        %560 = vmatprep.subr.bf16.mxu0 0
        %561 = vmatpush1.bf16.msra.mxu0 %v542
        %562 = vmatprep.subr.bf16.mxu0 0
        %563 = vmatpush1.bf16.msra.mxu0 %v543
        %564 = vmatprep.subr.bf16.mxu0 0
        %565 = vmatpush1.bf16.msra.mxu0 %v544
        %566 = vmatprep.subr.bf16.mxu0 0
        %567 = vmatpush1.bf16.msra.mxu0 %v545
        %568 = vmatprep.subr.bf16.mxu0 0
        %569 = vmatpush1.bf16.msra.mxu0 %v546
        %570 = vmatprep.subr.bf16.mxu0 0
        %571 = vmatpush1.bf16.msra.mxu0 %v547
        %572 = vmatprep.subr.bf16.mxu0 0
        %573 = vmatpush1.bf16.msra.mxu0 0
        %574 = vmatprep.subr.bf16.mxu0 0
        %575 = vmatpush1.bf16.msra.mxu0 0
        %576 = vmatprep.subr.bf16.mxu0 0
        %577 = vmatpush1.bf16.msra.mxu0 0
        %578 = vmatprep.subr.bf16.mxu0 0
        %579 = vmatpush1.bf16.msra.mxu0 0
        %580 = vmatprep.subr.bf16.mxu0 0
        %581 = vmatpush1.bf16.msra.mxu0 0
        %582 = vmatprep.subr.bf16.mxu0 0
        %583 = vmatpush1.bf16.msra.mxu0 0
        %584 = vmatprep.subr.bf16.mxu0 0
        %585 = vmatpush1.bf16.msra.mxu0 0
        %586 = vmatprep.subr.bf16.mxu0 0
        %587 = vmatpush1.bf16.msra.mxu0 0
        %588 = vmatprep.mubr.bf16.mxu0 0
        %589 = vmatmul.mubr.bf16.gmra.mrb[0].mxu0 %v491
        %v590 = vpop.f32.mrb[0].mxu0
        %v591 = vadd.f32 0.0, %v590
        %v592 = vpop.f32.mrb[0].mxu0
        %v593 = vpop.f32.mrb[0].mxu0
        %v594 = vadd.f32 0.0, %v593
        %v595 = vpop.f32.mrb[0].mxu0
        %596 = vdwg.mxu0
        %v597 = vmax.f32 %v591, 1e-05
        %v598 = vmax.f32 %v594, 1e-05
        %v599 = vlog2.pop %v597
        %v600 = vmul.f32 %v599, 0.6931472
        %v601 = vlog2.pop %v598
        %v602 = vmul.f32 %v601, 0.6931472
        %603 = vst [vmem:[%s218] sm:$0xff] %v600
        %604 = vst [vmem:[%s218 + $0x8] sm:$0xff] %v602
        %s605 = sand.u32 %s97, 1
        %s606 = scalar_lea.sflag [#allocation4], %s605
        %s607 = sand.u32 %s97, 1
        %s608 = smul.addr %s607, 16
        %s609 = scalar_lea.vmem [#allocation8], %s608
        // Predicated region
        $region45: #{tpu_custom_call.1} parent=31 // pred_check
          %p610 = pneg %p107
        $region46: #{tpu_custom_call.1} parent=31 // pred_check_branch
          %612 = sbr.rel (%p610) target = $region48
        $region47: #{tpu_custom_call.1} parent=31 // pred_region
          %s613 = smul.u32 2, %s21
          %s615 = ssub.s32 256, 256
          %616 = vsyncadd %s606, %s615
          %s617 = smul.addr %s613, 128
          %s618 = scalar_lea.hbm %s3, %s617
          %s619 = sshll.u32 %s609, 4
          %s620 = int_to_ptr.vmem [resolvable:$true] %s619
          %625 = dma.vmem_to_hbm [thread:$0]  %s620, 256, %s618, %s606, 128, 128, 8
        $region48: #{tpu_custom_call.1} parent=31 // pred_fallthru
          _
      $region32: #{tpu_custom_call.1} parent=5 // pred_fallthru
        _
      %p626 = scmp.le.s32.totalorder 2, %s16
      // Predicated region
      $region49: #{tpu_custom_call.1} parent=5 // pred_check
        %p627 = pneg %p626
      $region50: #{tpu_custom_call.1} parent=5 // pred_check_branch
        %629 = sbr.rel (%p627) target = $region52
      $region51: #{tpu_custom_call.1} parent=5 // pred_region
        %s630 = ssub.s32 %s16, 2
        // Predicated region
        $region53: #{tpu_custom_call.1} parent=51 // pred_check
          %p631 = pneg %p113
        $region54: #{tpu_custom_call.1} parent=51 // pred_check_branch
          %633 = sbr.rel (%p631) target = $region56
        $region55: #{tpu_custom_call.1} parent=51 // pred_region
          %s634 = sand.u32 %s98, 1
          %s635 = scalar_lea.sflag [#allocation4], %s634
          %s636 = sand.u32 %s98, 1
          %s637 = smul.addr %s636, 16
          %s638 = scalar_lea.vmem [#allocation8], %s637
          %639 = dma.done %s635, 256
        $region56: #{tpu_custom_call.1} parent=51 // pred_fallthru
          _
      $region52: #{tpu_custom_call.1} parent=5 // pred_fallthru
        _
    $region6: #{tpu_custom_call.1} parent=1 // loop_footer
      %s20 = sadd.s32 1, %s16
    $region7: #{tpu_custom_call.1} parent=1 // loop_footer_branch
      %15 = sbr.rel target = $region3
    $region8: #{tpu_custom_call.1} parent=1 // loop_exit
      _
    %640 = vsyncpa [#allocation3], 1
    %s641 = scalar_lea.sflag [#allocation3], 1
    %642 = vsyncpa %s641, 1
    %643 = vsyncpa [#allocation6], 1
    %644 = vsyncpa [#allocation4], 1
    %s645 = scalar_lea.sflag [#allocation4], 1
    %646 = vsyncpa %s645, 1

// kernel: tpu_custom_call.1
$region0: #{tpu_custom_call.1}
  #allocation0 [shape = 'u32[]', space=smem, size = 0x4, offset = 0x4, fixed_abs, tag = 'smem constant byte address 0x4 - core index']
  #allocation1 [shape = 'u32[144,128]{1,0:T(1,128)}', space=vmem, size = 0x12000, scoped, tag = 'internal scratch']
  %s0 = inlined_call_operand.hbm [shape: bf16[32,256], index: 0, kind: input, shape index: {}]
  %s1 = inlined_call_operand.hbm [shape: bf16[256,256], index: 1, kind: input, shape index: {}]
  %s2 = inlined_call_operand.hbm [shape: bf16[128,128], index: 2, kind: input, shape index: {}]
  %s3 = inlined_call_operand.hbm [shape: f32[32,128], index: 3, kind: output, shape index: {}]
  %s4 = sld [smem:[#allocation0]]
  $region57: #{tpu_custom_call.1} parent=0
    _
  %s6 = ssub.s32 1, %s4
  %s7 = scalar_select 0, %s6, %s4
  $region1: #{tpu_custom_call.1} parent=0
    #allocation2 [shape = 'u8[16384]{0}', space=vmem, size = 0x4000, scoped, tag = 'input window, operand 0']
    #allocation3 [shape = 's32[2]{0}', space=sflag, size = 0x8, scoped, tag = 'scoped memory for tpu_custom_call.1']
    #allocation4 [shape = 's32[2]{0}', space=sflag, size = 0x8, scoped, tag = 'scoped memory for tpu_custom_call.1']
    #allocation5 [shape = 'u8[131072]{0}', space=vmem, size = 0x20000, scoped, tag = 'input window, operand 1, single buffered']
    #allocation6 [shape = 's32[1]{0}', space=sflag, size = 0x4, scoped, tag = 'scoped memory for tpu_custom_call.1']
    #allocation7 [shape = 'u8[32768]{0}', space=vmem, size = 0x8000, scoped, tag = 'input window, operand 2, single buffered']
    #allocation8 [shape = 'u8[16384]{0}', space=vmem, size = 0x4000, scoped, tag = 'output window, operand 0']
    %8 = vsyncpa [#allocation3], 0
    %s9 = scalar_lea.sflag [#allocation3], 1
    %10 = vsyncpa %s9, 0
    %11 = vsyncpa [#allocation6], 0
    %12 = vsyncpa [#allocation4], 0
    %s13 = scalar_lea.sflag [#allocation4], 1
    %14 = vsyncpa %s13, 0
    loop: start=0, step=1, limit=4
    $region2: #{tpu_custom_call.1} parent=1 // loop_pre_header
      _
    $region3: #{tpu_custom_call.1} parent=1 // loop_header
      %s16 = sphi 0, %s20
      %p17 = scmp.ge.s32.totalorder %s16, 4
      %s26 = sphi 0, %s28
      %s29 = sphi 0, %s26
      %s30 = sphi 0, %s29
      %s46 = sphi 0, %s30
      %s50 = sphi 0, %s50
      %s52 = sphi 0, %s50
      %s53 = sphi 0, %s52
      %s67 = sphi 0, %s53
      %s71 = sphi 0, %s71
      %s73 = sphi 0, %s71
      %s74 = sphi 0, %s73
      %s88 = sphi 0, %s74
      %s94 = sphi 0, %s96
      %s97 = sphi 0, %s94
      %s98 = sphi 0, %s97
      %s114 = sphi 0, %s98
    $region4: #{tpu_custom_call.1} parent=1 // loop_header_branch
      %19 = sbr.rel (%p17) target = $region8
    $region5: #{tpu_custom_call.1} parent=1 // loop_body
      %s21 = ssub.s32 %s16, 1
      %s22 = ssub.s32 %s16, 2
      %s23 = sadd.s32 %s16, 1
      %s24 = ssub.s32 %s16, %s23
      %p25 = scmp.eq.s32.totalorder %s24, 0
      %s27 = sadd.s32 %s26, 1
      %s28 = scalar_select %p25, %s26, %s27
      %p31 = pneg %p25
      %p32 = scmp.eq.s32.totalorder %s16, 1
      %p33 = por %p31, %p32
      %p34 = scmp.ne.s32.totalorder %s26, %s29
      %p35 = scmp.eq.s32.totalorder %s16, 0
      %p36 = por %p34, %p35
      %p37 = scmp.ne.s32.totalorder %s26, %s29
      %p38 = scmp.eq.s32.totalorder %s21, 1
      %p39 = por %p37, %p38
      %p40 = scmp.ne.s32.totalorder %s29, %s30
      %p41 = scmp.eq.s32.totalorder %s21, 0
      %p42 = por %p40, %p41
      %p43 = scmp.ne.s32.totalorder %s29, %s30
      %p44 = scmp.eq.s32.totalorder %s22, 1
      %p45 = por %p43, %p44
      %p47 = scmp.ne.s32.totalorder %s30, %s46
      %p48 = scmp.eq.s32.totalorder %s22, 0
      %p49 = por %p47, %p48
      %s51 = sadd.s32 %s50, 1
      %p54 = scmp.eq.s32.totalorder %s16, 1
      %p55 = scmp.ne.s32.totalorder %s50, %s52
      %p56 = scmp.eq.s32.totalorder %s16, 0
      %p57 = por %p55, %p56
      %p58 = scmp.ne.s32.totalorder %s50, %s52
      %p59 = scmp.eq.s32.totalorder %s21, 1
      %p60 = por %p58, %p59
      %p61 = scmp.ne.s32.totalorder %s52, %s53
      %p62 = scmp.eq.s32.totalorder %s21, 0
      %p63 = por %p61, %p62
      %p64 = scmp.ne.s32.totalorder %s52, %s53
      %p65 = scmp.eq.s32.totalorder %s22, 1
      %p66 = por %p64, %p65
      %p68 = scmp.ne.s32.totalorder %s53, %s67
      %p69 = scmp.eq.s32.totalorder %s22, 0
      %p70 = por %p68, %p69
      %s72 = sadd.s32 %s71, 1
      %p75 = scmp.eq.s32.totalorder %s16, 1
      %p76 = scmp.ne.s32.totalorder %s71, %s73
      %p77 = scmp.eq.s32.totalorder %s16, 0
      %p78 = por %p76, %p77
      %p79 = scmp.ne.s32.totalorder %s71, %s73
      %p80 = scmp.eq.s32.totalorder %s21, 1
      %p81 = por %p79, %p80
      %p82 = scmp.ne.s32.totalorder %s73, %s74
      %p83 = scmp.eq.s32.totalorder %s21, 0
      %p84 = por %p82, %p83
      %p85 = scmp.ne.s32.totalorder %s73, %s74
      %p86 = scmp.eq.s32.totalorder %s22, 1
      %p87 = por %p85, %p86
      %p89 = scmp.ne.s32.totalorder %s74, %s88
      %p90 = scmp.eq.s32.totalorder %s22, 0
      %p91 = por %p89, %p90
      %s92 = ssub.s32 %s16, %s23
      %p93 = scmp.eq.s32.totalorder %s92, 0
      %s95 = sadd.s32 %s94, 1
      %s96 = scalar_select %p93, %s94, %s95
      %p99 = pneg %p93
      %p100 = scmp.eq.s32.totalorder %s16, 1
      %p101 = por %p99, %p100
      %p102 = scmp.ne.s32.totalorder %s94, %s97
      %p103 = scmp.eq.s32.totalorder %s16, 0
      %p104 = por %p102, %p103
      %p105 = scmp.ne.s32.totalorder %s94, %s97
      %p106 = scmp.eq.s32.totalorder %s21, 1
      %p107 = por %p105, %p106
      %p108 = scmp.ne.s32.totalorder %s97, %s98
      %p109 = scmp.eq.s32.totalorder %s21, 0
      %p110 = por %p108, %p109
      %p111 = scmp.ne.s32.totalorder %s97, %s98
      %p112 = scmp.eq.s32.totalorder %s22, 1
      %p113 = por %p111, %p112
      %p115 = scmp.ne.s32.totalorder %s98, %s114
      %p116 = scmp.eq.s32.totalorder %s22, 0
      %p117 = por %p115, %p116
      %p118 = scmp.le.s32.totalorder 1, %s16
      %p119 = scmp.lt.s32.totalorder %s16, 3
      %p120 = pnand %p118, %p119
      %p121 = pneg %p120
      // Predicated region
      $region9: #{tpu_custom_call.1} parent=5 // pred_check
        _
      $region10: #{tpu_custom_call.1} parent=5 // pred_check_branch
        %123 = sbr.rel (%p120) target = $region12
      $region11: #{tpu_custom_call.1} parent=5 // pred_region
        %s124 = ssub.s32 %s16, 1
        // Predicated region
        $region13: #{tpu_custom_call.1} parent=11 // pred_check
          %p125 = pneg %p63
        $region14: #{tpu_custom_call.1} parent=11 // pred_check_branch
          %127 = sbr.rel (%p125) target = $region16
        $region15: #{tpu_custom_call.1} parent=11 // pred_region
          %s129 = ssub.s32 4096, 4096
          %130 = vsyncadd [#allocation6], %s129
          %s131 = sshll.u32 [#allocation5], 4
          %s132 = int_to_ptr.vmem [resolvable:$true] %s131
          %137 = dma.hbm_to_vmem [thread:$0]  %s1, 4096, %s132, [#allocation6], 128, 128, 8
        $region16: #{tpu_custom_call.1} parent=11 // pred_fallthru
          _
        // Predicated region
        $region17: #{tpu_custom_call.1} parent=11 // pred_check
          %p138 = pneg %p84
        $region18: #{tpu_custom_call.1} parent=11 // pred_check_branch
          %140 = sbr.rel (%p138) target = $region20
        $region19: #{tpu_custom_call.1} parent=11 // pred_region
          %s142 = ssub.s32 1024, 1024
          %143 = vsyncadd [#allocation6], %s142
          %s144 = sshll.u32 [#allocation7], 4
          %s145 = int_to_ptr.vmem [resolvable:$true] %s144
          %150 = dma.hbm_to_vmem [thread:$0]  %s2, 1024, %s145, [#allocation6], 64, 64, 4
        $region20: #{tpu_custom_call.1} parent=11 // pred_fallthru
          _
      $region12: #{tpu_custom_call.1} parent=5 // pred_fallthru
        _
      %p151 = scmp.lt.s32.totalorder %s16, 2
      // Predicated region
      $region21: #{tpu_custom_call.1} parent=5 // pred_check
        %p152 = pneg %p151
      $region22: #{tpu_custom_call.1} parent=5 // pred_check_branch
        %154 = sbr.rel (%p152) target = $region24
      $region23: #{tpu_custom_call.1} parent=5 // pred_region
        // Predicated region
        $region25: #{tpu_custom_call.1} parent=23 // pred_check
          %p155 = pneg %p36
        $region26: #{tpu_custom_call.1} parent=23 // pred_check_branch
          %157 = sbr.rel (%p155) target = $region28
        $region27: #{tpu_custom_call.1} parent=23 // pred_region
          %s158 = sand.u32 %s26, 1
          %s159 = scalar_lea.sflag [#allocation3], %s158
          %s160 = sand.u32 %s26, 1
          %s161 = smul.addr %s160, 16
          %s162 = scalar_lea.vmem [#allocation2], %s161
          %s163 = smul.u32 2, %s16
          %s165 = ssub.s32 256, 256
          %166 = vsyncadd %s159, %s165
          %s167 = smul.addr %s163, 2
          %s168 = smul.addr %s167, 64
          %s169 = scalar_lea.hbm %s0, %s168
          %s170 = sshll.u32 %s162, 4
          %s171 = int_to_ptr.vmem [resolvable:$true] %s170
          %176 = dma.hbm_to_vmem [thread:$0]  %s169, 256, %s171, %s159, 128, 128, 8
        $region28: #{tpu_custom_call.1} parent=23 // pred_fallthru
          _
      $region24: #{tpu_custom_call.1} parent=5 // pred_fallthru
        _
      %p177 = scmp.le.s32.totalorder 1, %s16
      %p178 = scmp.lt.s32.totalorder %s16, 3
      %p179 = pnand %p177, %p178
      %p180 = pneg %p179
      // Predicated region
      $region29: #{tpu_custom_call.1} parent=5 // pred_check
        _
      $region30: #{tpu_custom_call.1} parent=5 // pred_check_branch
        %182 = sbr.rel (%p179) target = $region32
      $region31: #{tpu_custom_call.1} parent=5 // pred_region
        %s183 = ssub.s32 %s16, 1
        %s184 = sand.u32 %s29, 1
        %s185 = scalar_lea.sflag [#allocation3], %s184
        %s186 = sand.u32 %s29, 1
        %s187 = smul.addr %s186, 16
        %s188 = scalar_lea.vmem [#allocation2], %s187
        // Predicated region
        $region33: #{tpu_custom_call.1} parent=31 // pred_check
          %p189 = pneg %p42
        $region34: #{tpu_custom_call.1} parent=31 // pred_check_branch
          %191 = sbr.rel (%p189) target = $region36
        $region35: #{tpu_custom_call.1} parent=31 // pred_region
          %192 = dma.done %s185, 256
        $region36: #{tpu_custom_call.1} parent=31 // pred_fallthru
          _
        // Predicated region
        $region37: #{tpu_custom_call.1} parent=31 // pred_check
          %p193 = pneg %p63
        $region38: #{tpu_custom_call.1} parent=31 // pred_check_branch
          %195 = sbr.rel (%p193) target = $region40
        $region39: #{tpu_custom_call.1} parent=31 // pred_region
          %196 = dma.done [#allocation6], 4096
        $region40: #{tpu_custom_call.1} parent=31 // pred_fallthru
          _
        // Predicated region
        $region41: #{tpu_custom_call.1} parent=31 // pred_check
          %p197 = pneg %p84
        $region42: #{tpu_custom_call.1} parent=31 // pred_check_branch
          %199 = sbr.rel (%p197) target = $region44
        $region43: #{tpu_custom_call.1} parent=31 // pred_region
          %200 = dma.done [#allocation6], 1024
        $region44: #{tpu_custom_call.1} parent=31 // pred_fallthru
          _
        %s201 = sand.u32 %s29, 1
        %s202 = scalar_lea.sflag [#allocation3], %s201
        %s203 = sand.u32 %s29, 1
        %s204 = smul.addr %s203, 16
        %s205 = scalar_lea.vmem [#allocation2], %s204
        %p206 = pneg %p42
        %p207 = pneg %p39
        %p208 = pneg %p63
        %p209 = pneg %p60
        %p210 = pneg %p84
        %p211 = pneg %p81
        %p212 = pneg %p110
        %p213 = pneg %p107
        %s214 = sand.u32 %s97, 1
        %s215 = scalar_lea.sflag [#allocation4], %s214
        %s216 = sand.u32 %s97, 1
        %s217 = smul.addr %s216, 16
        %s218 = scalar_lea.vmem [#allocation8], %s217
        %s219 = smul.u32 2, %s21
        %s220 = smul.u32 2, %s21
        %v222 = vld [vmem:[%s188] sm:$0xff]
        %v223 = vld [vmem:[%s188 + $0x8] sm:$0xff]
        %v224 = vld [vmem:[#allocation5] sm:$0xff]
        %v225 = vld [vmem:[#allocation5 + $0x8] sm:$0xff]
        %v226 = vld [vmem:[#allocation5 + $0x10] sm:$0xff]
        %v227 = vld [vmem:[#allocation5 + $0x18] sm:$0xff]
        %v228 = vld [vmem:[#allocation5 + $0x20] sm:$0xff]
        %v229 = vld [vmem:[#allocation5 + $0x28] sm:$0xff]
        %v230 = vld [vmem:[#allocation5 + $0x30] sm:$0xff]
        %v231 = vld [vmem:[#allocation5 + $0x38] sm:$0xff]
        %v232 = vld [vmem:[#allocation5 + $0x40] sm:$0xff]
        %v233 = vld [vmem:[#allocation5 + $0x48] sm:$0xff]
        %v234 = vld [vmem:[#allocation5 + $0x50] sm:$0xff]
        %v235 = vld [vmem:[#allocation5 + $0x58] sm:$0xff]
        %v236 = vld [vmem:[#allocation5 + $0x60] sm:$0xff]
        %v237 = vld [vmem:[#allocation5 + $0x68] sm:$0xff]
        %v238 = vld [vmem:[#allocation5 + $0x70] sm:$0xff]
        %v239 = vld [vmem:[#allocation5 + $0x78] sm:$0xff]
        %v240 = vld [vmem:[#allocation5 + $0x80] sm:$0xff]
        %v241 = vld [vmem:[#allocation5 + $0x88] sm:$0xff]
        %v242 = vld [vmem:[#allocation5 + $0x90] sm:$0xff]
        %v243 = vld [vmem:[#allocation5 + $0x98] sm:$0xff]
        %v244 = vld [vmem:[#allocation5 + $0xa0] sm:$0xff]
        %v245 = vld [vmem:[#allocation5 + $0xa8] sm:$0xff]
        %v246 = vld [vmem:[#allocation5 + $0xb0] sm:$0xff]
        %v247 = vld [vmem:[#allocation5 + $0xb8] sm:$0xff]
        %v248 = vld [vmem:[#allocation5 + $0xc0] sm:$0xff]
        %v249 = vld [vmem:[#allocation5 + $0xc8] sm:$0xff]
        %v250 = vld [vmem:[#allocation5 + $0xd0] sm:$0xff]
        %v251 = vld [vmem:[#allocation5 + $0xd8] sm:$0xff]
        %v252 = vld [vmem:[#allocation5 + $0xe0] sm:$0xff]
        %v253 = vld [vmem:[#allocation5 + $0xe8] sm:$0xff]
        %v254 = vld [vmem:[#allocation5 + $0xf0] sm:$0xff]
        %v255 = vld [vmem:[#allocation5 + $0xf8] sm:$0xff]
        %v258 = vunpack.c.l.b16 %v222
        %v259 = vunpack.c.h.b16 %v222
        %v260 = vunpack.c.l.b16 %v223
        %v261 = vunpack.c.h.b16 %v223
        %v262 = vpack.c.b16 %v260, %v258
        %v263 = vpack.c.b16 %v261, %v259
        %v298 = vunpack.c.l.b16 %v224
        %v299 = vunpack.c.h.b16 %v224
        %v300 = vunpack.c.l.b16 %v225
        %v301 = vunpack.c.h.b16 %v225
        %v302 = vunpack.c.l.b16 %v226
        %v303 = vunpack.c.h.b16 %v226
        %v304 = vunpack.c.l.b16 %v227
        %v305 = vunpack.c.h.b16 %v227
        %v306 = vunpack.c.l.b16 %v228
        %v307 = vunpack.c.h.b16 %v228
        %v308 = vunpack.c.l.b16 %v229
        %v309 = vunpack.c.h.b16 %v229
        %v310 = vunpack.c.l.b16 %v230
        %v311 = vunpack.c.h.b16 %v230
        %v312 = vunpack.c.l.b16 %v231
        %v313 = vunpack.c.h.b16 %v231
        %v314 = vunpack.c.l.b16 %v232
        %v315 = vunpack.c.h.b16 %v232
        %v316 = vunpack.c.l.b16 %v233
        %v317 = vunpack.c.h.b16 %v233
        %v318 = vunpack.c.l.b16 %v234
        %v319 = vunpack.c.h.b16 %v234
        %v320 = vunpack.c.l.b16 %v235
        %v321 = vunpack.c.h.b16 %v235
        %v322 = vunpack.c.l.b16 %v236
        %v323 = vunpack.c.h.b16 %v236
        %v324 = vunpack.c.l.b16 %v237
        %v325 = vunpack.c.h.b16 %v237
        %v326 = vunpack.c.l.b16 %v238
        %v327 = vunpack.c.h.b16 %v238
        %v328 = vunpack.c.l.b16 %v239
        %v329 = vunpack.c.h.b16 %v239
        %v330 = vunpack.c.l.b16 %v240
        %v331 = vunpack.c.h.b16 %v240
        %v332 = vunpack.c.l.b16 %v241
        %v333 = vunpack.c.h.b16 %v241
        %v334 = vunpack.c.l.b16 %v242
        %v335 = vunpack.c.h.b16 %v242
        %v336 = vunpack.c.l.b16 %v243
        %v337 = vunpack.c.h.b16 %v243
        %v338 = vunpack.c.l.b16 %v244
        %v339 = vunpack.c.h.b16 %v244
        %v340 = vunpack.c.l.b16 %v245
        %v341 = vunpack.c.h.b16 %v245
        %v342 = vunpack.c.l.b16 %v246
        %v343 = vunpack.c.h.b16 %v246
        %v344 = vunpack.c.l.b16 %v247
        %v345 = vunpack.c.h.b16 %v247
        %v346 = vunpack.c.l.b16 %v248
        %v347 = vunpack.c.h.b16 %v248
        %v348 = vunpack.c.l.b16 %v249
        %v349 = vunpack.c.h.b16 %v249
        %v350 = vunpack.c.l.b16 %v250
        %v351 = vunpack.c.h.b16 %v250
        %v352 = vunpack.c.l.b16 %v251
        %v353 = vunpack.c.h.b16 %v251
        %v354 = vunpack.c.l.b16 %v252
        %v355 = vunpack.c.h.b16 %v252
        %v356 = vunpack.c.l.b16 %v253
        %v357 = vunpack.c.h.b16 %v253
        %v358 = vunpack.c.l.b16 %v254
        %v359 = vunpack.c.h.b16 %v254
        %v360 = vunpack.c.l.b16 %v255
        %v361 = vunpack.c.h.b16 %v255
        %v362 = vpack.c.b16 %v300, %v298
        %v363 = vpack.c.b16 %v301, %v299
        %v364 = vpack.c.b16 %v304, %v302
        %v365 = vpack.c.b16 %v305, %v303
        %v366 = vpack.c.b16 %v308, %v306
        %v367 = vpack.c.b16 %v309, %v307
        %v368 = vpack.c.b16 %v312, %v310
        %v369 = vpack.c.b16 %v313, %v311
        %v370 = vpack.c.b16 %v316, %v314
        %v371 = vpack.c.b16 %v317, %v315
        %v372 = vpack.c.b16 %v320, %v318
        %v373 = vpack.c.b16 %v321, %v319
        %v374 = vpack.c.b16 %v324, %v322
        %v375 = vpack.c.b16 %v325, %v323
        %v376 = vpack.c.b16 %v328, %v326
        %v377 = vpack.c.b16 %v329, %v327
        %v378 = vpack.c.b16 %v332, %v330
        %v379 = vpack.c.b16 %v333, %v331
        %v380 = vpack.c.b16 %v336, %v334
        %v381 = vpack.c.b16 %v337, %v335
        %v382 = vpack.c.b16 %v340, %v338
        %v383 = vpack.c.b16 %v341, %v339
        %v384 = vpack.c.b16 %v344, %v342
        %v385 = vpack.c.b16 %v345, %v343
        %v386 = vpack.c.b16 %v348, %v346
        %v387 = vpack.c.b16 %v349, %v347
        %v388 = vpack.c.b16 %v352, %v350
        %v389 = vpack.c.b16 %v353, %v351
        %v390 = vpack.c.b16 %v356, %v354
        %v391 = vpack.c.b16 %v357, %v355
        %v392 = vpack.c.b16 %v360, %v358
        %v393 = vpack.c.b16 %v361, %v359
        %426 = vmatprep.subr.bf16.mxu0 %v363
        %427 = vmatpush1.bf16.msra.mxu0 %v362
        %428 = vmatprep.subr.bf16.mxu0 %v365
        %429 = vmatpush1.bf16.msra.mxu0 %v364
        %430 = vmatprep.subr.bf16.mxu0 %v367
        %431 = vmatpush1.bf16.msra.mxu0 %v366
        %432 = vmatprep.subr.bf16.mxu0 %v369
        %433 = vmatpush1.bf16.msra.mxu0 %v368
        %434 = vmatprep.subr.bf16.mxu0 %v371
        %435 = vmatpush1.bf16.msra.mxu0 %v370
        %436 = vmatprep.subr.bf16.mxu0 %v373
        %437 = vmatpush1.bf16.msra.mxu0 %v372
        %438 = vmatprep.subr.bf16.mxu0 %v375
        %439 = vmatpush1.bf16.msra.mxu0 %v374
        %440 = vmatprep.subr.bf16.mxu0 %v377
        %441 = vmatpush1.bf16.msra.mxu0 %v376
        %442 = vmatprep.subr.bf16.mxu0 %v379
        %443 = vmatpush1.bf16.msra.mxu0 %v378
        %444 = vmatprep.subr.bf16.mxu0 %v381
        %445 = vmatpush1.bf16.msra.mxu0 %v380
        %446 = vmatprep.subr.bf16.mxu0 %v383
        %447 = vmatpush1.bf16.msra.mxu0 %v382
        %448 = vmatprep.subr.bf16.mxu0 %v385
        %449 = vmatpush1.bf16.msra.mxu0 %v384
        %450 = vmatprep.subr.bf16.mxu0 %v387
        %451 = vmatpush1.bf16.msra.mxu0 %v386
        %452 = vmatprep.subr.bf16.mxu0 %v389
        %453 = vmatpush1.bf16.msra.mxu0 %v388
        %454 = vmatprep.subr.bf16.mxu0 %v391
        %455 = vmatpush1.bf16.msra.mxu0 %v390
        %456 = vmatprep.subr.bf16.mxu0 %v393
        %457 = vmatpush1.bf16.msra.mxu0 %v392
        %458 = vmatprep.mubr.bf16.mxu0 %v263
        %459 = vmatmul.mubr.bf16.gmra.mrb[0].mxu0 %v262
        %v460 = vpop.f32.mrb[0].mxu0
        %v461 = vadd.f32 0.0, %v460
        %v462 = vpop.f32.mrb[0].mxu0
        %v463 = vadd.f32 0.0, %v462
        %v464 = vpop.f32.mrb[0].mxu0
        %v465 = vadd.f32 0.0, %v464
        %v466 = vpop.f32.mrb[0].mxu0
        %v467 = vadd.f32 0.0, %v466
        %468 = vdwg.mxu0
        %v469 = vmul.f32 %v461, %v461
        %v470 = vmul.f32 %v465, %v465
        %v471 = vmul.f32 %v463, %v463
        %v472 = vmul.f32 %v467, %v467
        %v473 = vadd.f32 %v469, %v471
        %v474 = vadd.f32 %v470, %v472
        %v475 = vadd.f32 %v473, 1e-06
        %v476 = vadd.f32 %v474, 1e-06
        %v477 = vrsqrt.pop %v475
        %v478 = vmul.f32 %v475, %v477
        %vm479 = vcmp.eq.f32.partialorder %v475, inf
        %v480 = vsel %vm479, %v475, %v478
        %vm481 = vcmp.eq.f32.partialorder %v475, 0.0
        %v482 = vand.u32 %v475, 2147483648
        %v483 = vsel %vm481, %v482, %v480
        %v484 = vrsqrt.pop %v476
        %v485 = vmul.f32 %v476, %v484
        %vm486 = vcmp.eq.f32.partialorder %v476, inf
        %v487 = vsel %vm486, %v476, %v485
        %vm488 = vcmp.eq.f32.partialorder %v476, 0.0
        %v489 = vand.u32 %v476, 2147483648
        %v490 = vsel %vm488, %v489, %v487
        %v491 = vpack.c.bf16 %v490, %v483
        %v492 = vld [vmem:[#allocation7] sm:$0xf]
        %v493 = vld [vmem:[#allocation7 + $0x4] sm:$0xf]
        %v494 = vld [vmem:[#allocation7 + $0x8] sm:$0xf]
        %v495 = vld [vmem:[#allocation7 + $0xc] sm:$0xf]
        %v496 = vld [vmem:[#allocation7 + $0x10] sm:$0xf]
        %v497 = vld [vmem:[#allocation7 + $0x14] sm:$0xf]
        %v498 = vld [vmem:[#allocation7 + $0x18] sm:$0xf]
        %v499 = vld [vmem:[#allocation7 + $0x1c] sm:$0xf]
        %v500 = vld [vmem:[#allocation7 + $0x20] sm:$0xf]
        %v501 = vld [vmem:[#allocation7 + $0x24] sm:$0xf]
        %v502 = vld [vmem:[#allocation7 + $0x28] sm:$0xf]
        %v503 = vld [vmem:[#allocation7 + $0x2c] sm:$0xf]
        %v504 = vld [vmem:[#allocation7 + $0x30] sm:$0xf]
        %v505 = vld [vmem:[#allocation7 + $0x34] sm:$0xf]
        %v506 = vld [vmem:[#allocation7 + $0x38] sm:$0xf]
        %v507 = vld [vmem:[#allocation7 + $0x3c] sm:$0xf]
        %v524 = vunpack.c.l.b16 %v492
        %v525 = vunpack.c.l.b16 %v493
        %v526 = vunpack.c.l.b16 %v494
        %v527 = vunpack.c.l.b16 %v495
        %v528 = vunpack.c.l.b16 %v496
        %v529 = vunpack.c.l.b16 %v497
        %v530 = vunpack.c.l.b16 %v498
        %v531 = vunpack.c.l.b16 %v499
        %v532 = vunpack.c.l.b16 %v500
        %v533 = vunpack.c.l.b16 %v501
        %v534 = vunpack.c.l.b16 %v502
        %v535 = vunpack.c.l.b16 %v503
        %v536 = vunpack.c.l.b16 %v504
        %v537 = vunpack.c.l.b16 %v505
        %v538 = vunpack.c.l.b16 %v506
        %v539 = vunpack.c.l.b16 %v507
        %v540 = vpack.c.b16 %v525, %v524
        %v541 = vpack.c.b16 %v527, %v526
        %v542 = vpack.c.b16 %v529, %v528
        %v543 = vpack.c.b16 %v531, %v530
        %v544 = vpack.c.b16 %v533, %v532
        %v545 = vpack.c.b16 %v535, %v534
        %v546 = vpack.c.b16 %v537, %v536
        %v547 = vpack.c.b16 %v539, %v538
        %556 = vmatprep.subr.bf16.mxu0 0
        %557 = vmatpush1.bf16.msra.mxu0 %v540
        %558 = vmatprep.subr.bf16.mxu0 0
        %559 = vmatpush1.bf16.msra.mxu0 %v541
        %560 = vmatprep.subr.bf16.mxu0 0
        %561 = vmatpush1.bf16.msra.mxu0 %v542
        %562 = vmatprep.subr.bf16.mxu0 0
        %563 = vmatpush1.bf16.msra.mxu0 %v543
        %564 = vmatprep.subr.bf16.mxu0 0
        %565 = vmatpush1.bf16.msra.mxu0 %v544
        %566 = vmatprep.subr.bf16.mxu0 0
        %567 = vmatpush1.bf16.msra.mxu0 %v545
        %568 = vmatprep.subr.bf16.mxu0 0
        %569 = vmatpush1.bf16.msra.mxu0 %v546
        %570 = vmatprep.subr.bf16.mxu0 0
        %571 = vmatpush1.bf16.msra.mxu0 %v547
        %572 = vmatprep.subr.bf16.mxu0 0
        %573 = vmatpush1.bf16.msra.mxu0 0
        %574 = vmatprep.subr.bf16.mxu0 0
        %575 = vmatpush1.bf16.msra.mxu0 0
        %576 = vmatprep.subr.bf16.mxu0 0
        %577 = vmatpush1.bf16.msra.mxu0 0
        %578 = vmatprep.subr.bf16.mxu0 0
        %579 = vmatpush1.bf16.msra.mxu0 0
        %580 = vmatprep.subr.bf16.mxu0 0
        %581 = vmatpush1.bf16.msra.mxu0 0
        %582 = vmatprep.subr.bf16.mxu0 0
        %583 = vmatpush1.bf16.msra.mxu0 0
        %584 = vmatprep.subr.bf16.mxu0 0
        %585 = vmatpush1.bf16.msra.mxu0 0
        %586 = vmatprep.subr.bf16.mxu0 0
        %587 = vmatpush1.bf16.msra.mxu0 0
        %588 = vmatprep.mubr.bf16.mxu0 0
        %589 = vmatmul.mubr.bf16.gmra.mrb[0].mxu0 %v491
        %v590 = vpop.f32.mrb[0].mxu0
        %v591 = vadd.f32 0.0, %v590
        %v592 = vpop.f32.mrb[0].mxu0
        %v593 = vpop.f32.mrb[0].mxu0
        %v594 = vadd.f32 0.0, %v593
        %v595 = vpop.f32.mrb[0].mxu0
        %596 = vdwg.mxu0
        %v597 = vmax.f32 %v591, 1e-05
        %v598 = vmax.f32 %v594, 1e-05
        %v599 = vlog2.pop %v597
        %v600 = vmul.f32 %v599, 0.6931472
        %v601 = vlog2.pop %v598
        %v602 = vmul.f32 %v601, 0.6931472
        %603 = vst [vmem:[%s218] sm:$0xff] %v600
        %604 = vst [vmem:[%s218 + $0x8] sm:$0xff] %v602
        %s605 = sand.u32 %s97, 1
        %s606 = scalar_lea.sflag [#allocation4], %s605
        %s607 = sand.u32 %s97, 1
        %s608 = smul.addr %s607, 16
        %s609 = scalar_lea.vmem [#allocation8], %s608
        // Predicated region
        $region45: #{tpu_custom_call.1} parent=31 // pred_check
          %p610 = pneg %p107
        $region46: #{tpu_custom_call.1} parent=31 // pred_check_branch
          %612 = sbr.rel (%p610) target = $region48
        $region47: #{tpu_custom_call.1} parent=31 // pred_region
          %s613 = smul.u32 2, %s21
          %s615 = ssub.s32 256, 256
          %616 = vsyncadd %s606, %s615
          %s617 = smul.addr %s613, 128
          %s618 = scalar_lea.hbm %s3, %s617
          %s619 = sshll.u32 %s609, 4
          %s620 = int_to_ptr.vmem [resolvable:$true] %s619
          %625 = dma.vmem_to_hbm [thread:$0]  %s620, 256, %s618, %s606, 128, 128, 8
        $region48: #{tpu_custom_call.1} parent=31 // pred_fallthru
          _
      $region32: #{tpu_custom_call.1} parent=5 // pred_fallthru
        _
      %p626 = scmp.le.s32.totalorder 2, %s16
      // Predicated region
      $region49: #{tpu_custom_call.1} parent=5 // pred_check
        %p627 = pneg %p626
      $region50: #{tpu_custom_call.1} parent=5 // pred_check_branch
        %629 = sbr.rel (%p627) target = $region52
      $region51: #{tpu_custom_call.1} parent=5 // pred_region
        %s630 = ssub.s32 %s16, 2
        // Predicated region
        $region53: #{tpu_custom_call.1} parent=51 // pred_check
          %p631 = pneg %p113
        $region54: #{tpu_custom_call.1} parent=51 // pred_check_branch
          %633 = sbr.rel (%p631) target = $region56
        $region55: #{tpu_custom_call.1} parent=51 // pred_region
          %s634 = sand.u32 %s98, 1
          %s635 = scalar_lea.sflag [#allocation4], %s634
          %s636 = sand.u32 %s98, 1
          %s637 = smul.addr %s636, 16
          %s638 = scalar_lea.vmem [#allocation8], %s637
          %639 = dma.done %s635, 256
        $region56: #{tpu_custom_call.1} parent=51 // pred_fallthru
          _
      $region52: #{tpu_custom_call.1} parent=5 // pred_fallthru
        _
    $region6: #{tpu_custom_call.1} parent=1 // loop_footer
      %s20 = sadd.s32 1, %s16
    $region7: #{tpu_custom_call.1} parent=1 // loop_footer_branch
      %15 = sbr.rel target = $region3
    $region8: #{tpu_custom_call.1} parent=1 // loop_exit
      _
    %640 = vsyncpa [#allocation3], 1
    %s641 = scalar_lea.sflag [#allocation3], 1
    %642 = vsyncpa %s641, 1
    %643 = vsyncpa [#allocation6], 1
    %644 = vsyncpa [#allocation4], 1
    %s645 = scalar_lea.sflag [#allocation4], 1
    %646 = vsyncpa %s645, 1

</llo_original>
